<compile_context>
chip_gen: v5e
topology: v5e:2x2
jax: 0.10.0
libtpu: 0.0.40
codegen_flags: <defaults>
</compile_context>

<pallas_src>
import jax
import jax.numpy as jnp
from jax import lax
from jax.experimental import pallas as pl
from jax.experimental.pallas import tpu as pltpu

_MIB = 1024 * 1024


def _round_up(x: int, m: int) -> int:
    return ((x + m - 1) // m) * m


def _vmem_capacity_bytes() -> int:
    try:
        info = pltpu.get_tpu_info()
        cap = getattr(info, "vmem_capacity_bytes", None)
        if cap:
            return int(cap)
    except Exception:
        pass
    return 64 * _MIB  # conservative fallback: v7x per-TensorCore VMEM


def _choose_tm(m_pad: int, cap_rows: int) -> int:
    """Largest divisor of m_pad that is a multiple of the row granule and <= cap_rows.

    Prefers an even grid_m (dual-TensorCore balance) when that costs at most a 2x
    smaller tile, and splits a single oversized tile so both cores get work.
    """
    gran = 128 if m_pad % 128 == 0 else 8
    cap_rows = max(gran, (cap_rows // gran) * gran)

    def best_divisor(pred):
        best = 0
        t = gran
        limit = min(cap_rows, m_pad)
        while t <= limit:
            if m_pad % t == 0 and pred(m_pad // t):
                best = t
            t += gran
        return best

    tm = best_divisor(lambda g: True)
    if tm == 0:  # unreachable (gran divides m_pad), kept for safety
        tm = gran
    grid_m = m_pad // tm
    if grid_m > 1 and grid_m % 2 == 1:
        tm_even = best_divisor(lambda g: g % 2 == 0)
        if tm_even > 0 and tm_even >= tm // 2:
            tm = tm_even
    elif grid_m == 1 and m_pad >= 1024 and (m_pad // 2) % gran == 0:
        tm = m_pad // 2
    return tm


def _patch_embed_kernel(p_ref, w_ref, b_ref, o_ref):
    # p_ref: (TM, K_p)   compute_dtype flattened-patch tile
    # w_ref: (K_p, D_p)  compute_dtype projection weight (resident across grid)
    # b_ref: (1, D_p)    f32 bias
    # o_ref: (TM, D_p)   out_dtype output tile
    acc = jnp.dot(p_ref[...], w_ref[...], preferred_element_type=jnp.float32)
    o_ref[...] = (acc + b_ref[...]).astype(o_ref.dtype)


def patch_embed(x, weight, bias, patch_size, *,
                compute_dtype=jnp.bfloat16, out_dtype=None, pad_embed_dim=True):
    """x: (B, C, H, W); weight: (D, C, P, P); bias: (D,) -> (B, n_patches, D)."""
    B, C, H, W = x.shape
    D = weight.shape[0]
    P = patch_size
    assert H % P == 0 and W % P == 0, (
        "Conv2d(stride=P, padding=0) drops remainder pixels; require H, W % P == 0")
    gh, gw = H // P, W // P
    n_patches = gh * gw
    K = C * P * P
    M = B * n_patches
    out_dtype = jnp.dtype(x.dtype) if out_dtype is None else jnp.dtype(out_dtype)

    # Lane-dense padded contraction dim; embed dim padded only when requested
    # (on compute-limited v5e with D % 128 != 0, pad_embed_dim=False avoids ~33%
    # extra MXU work; block last dim == full array dim is legal either way).
    K_p = _round_up(K, 128)
    D_p = _round_up(D, 128) if pad_embed_dim else D

    in_bytes = jnp.dtype(compute_dtype).itemsize
    out_bytes = out_dtype.itemsize

    # M only needs sublane (8) granularity on the block's second-to-last dim.
    M_pad = _round_up(M, 8)

    # VMEM budget: double-buffered patch/output tiles + double-buffered resident
    # weight/bias must fit in ~55% of per-core VMEM (~35 MiB on v7x, ~70 MiB on
    # v5e/v6e), with an absolute TM cap of 2048.
    vmem_cap = _vmem_capacity_bytes()
    budget = int(0.55 * vmem_cap)
    resident = 2 * K_p * D_p * in_bytes + 2 * D_p * 4
    per_row = 2 * (K_p * in_bytes + D_p * out_bytes)
    cap_rows = min(2048, max(8, (budget - resident) // per_row))

    TM = _choose_tm(M_pad, cap_rows)
    grid_m = M_pad // TM

    # Patch extraction, flattened in (c, ph, pw) order to match the Conv2d weight
    # layout.  allow_input_fusion[0]=False keeps this as one contiguous XLA
    # relayout kernel (full-bandwidth stream into the pallas_call) rather than a
    # per-block fused gather with tiny innermost runs.
    patches = x.reshape(B, C, gh, P, gw, P)
    patches = patches.transpose(0, 2, 4, 1, 3, 5).reshape(M, K)
    if M_pad != M or K_p != K:
        patches = jnp.pad(patches, ((0, M_pad - M), (0, K_p - K)))
    patches = patches.astype(compute_dtype)

    # Conv weight (D, C, P, P) -> matmul weight (K_p, D_p).
    w_flat = weight.reshape(D, K).T
    if K_p != K or D_p != D:
        w_flat = jnp.pad(w_flat, ((0, K_p - K), (0, D_p - D)))
    w_flat = w_flat.astype(compute_dtype)

    # Bias stays f32 and is added to the f32 accumulator.
    b2d = bias.astype(jnp.float32)
    if D_p != D:
        b2d = jnp.pad(b2d, (0, D_p - D))
    b2d = b2d.reshape(1, D_p)

    vmem_need = 2 * TM * K_p * in_bytes + resident + 2 * TM * D_p * out_bytes
    vmem_limit = int(min(int(0.75 * vmem_cap),
                         max(vmem_need + 4 * _MIB, 32 * _MIB)))

    cost = pl.CostEstimate(
        flops=2 * M_pad * K_p * D_p,
        transcendentals=0,
        bytes_accessed=(M_pad * K_p * in_bytes
                        + K_p * D_p * in_bytes
                        + D_p * 4
                        + M_pad * D_p * out_bytes),
    )

    out = pl.pallas_call(
        _patch_embed_kernel,
        out_shape=jax.ShapeDtypeStruct((M_pad, D_p), out_dtype),
        grid_spec=pltpu.PrefetchScalarGridSpec(
            num_scalar_prefetch=0,
            grid=(grid_m,),
            in_specs=[
                pl.BlockSpec((TM, K_p), lambda i: (i, 0)),
                # Constant index_maps -> weight/bias blocks stay resident in VMEM.
                pl.BlockSpec((K_p, D_p), lambda i: (0, 0)),
                pl.BlockSpec((1, D_p), lambda i: (0, 0)),
            ],
            out_specs=pl.BlockSpec((TM, D_p), lambda i: (i, 0)),
        ),
        compiler_params=pltpu.CompilerParams(
            dimension_semantics=("parallel",),
            allow_input_fusion=[False, True, True],
            vmem_limit_bytes=vmem_limit,
        ),
        cost_estimate=cost,
    )(patches, w_flat, b2d)

    # When TM divides M and D is already lane-aligned this is a free view.
    if M_pad != M or D_p != D:
        out = out[:M, :D]
    return out.reshape(B, n_patches, D)


def _reference(x, weight, bias, patch_size):
    # Pure-JAX reference: strided conv (NCHW, OIHW) then flatten(2).transpose(1,2)
    y = lax.conv_general_dilated(
        x, weight,
        window_strides=(patch_size, patch_size),
        padding="VALID",
        dimension_numbers=("NCHW", "OIHW", "NCHW"),
    )
    y = y + bias.reshape(1, -1, 1, 1)
    B, D, gh, gw = y.shape
    return y.reshape(B, D, gh * gw).transpose(0, 2, 1)


if __name__ == "__main__":
    # Small shapes consistent with the module: img=16, patch=4, C=4, D=32, B=2
    B, C, H, W = 2, 4, 16, 16
    P = 4
    D = 32

    key = jax.random.PRNGKey(0)
    kx, kw, kb = jax.random.split(key, 3)
    x = jax.random.normal(kx, (B, C, H, W), dtype=jnp.float32)
    weight = jax.random.normal(kw, (D, C, P, P), dtype=jnp.float32) * 0.02
    bias = jax.random.normal(kb, (D,), dtype=jnp.float32) * 0.02

    fn = jax.jit(patch_embed, static_argnames=("patch_size",))
    out = fn(x, weight, bias, patch_size=P)
    out = jax.block_until_ready(out)

    ref = _reference(x, weight, bias, P)
    assert out.shape == (B, (H // P) * (W // P), D), out.shape
    # bf16 input/weight streams with f32 accumulation: expect ~1e-3-level
    # agreement with the f32 conv reference (not 1e-4).
    max_err = float(jnp.max(jnp.abs(out - ref)))
    assert max_err < 2e-2, f"mismatch vs conv reference: max_err={max_err}"

    print("KERNEL_OK")
</pallas_src>

<mosaic_0001>
module attributes {stable_mosaic.version = 11 : i64} {
  func.func @_patch_embed_kernel(%arg0: i32, %arg1: memref<32x128xbf16, #tpu.memory_space<vmem>>, %arg2: memref<128x128xbf16, #tpu.memory_space<vmem>>, %arg3: memref<1x128xf32, #tpu.memory_space<vmem>>, %arg4: memref<32x128xf32, #tpu.memory_space<vmem>>) attributes {dimension_semantics = [#tpu.dimension_semantics<parallel>], iteration_bounds = array<i64: 1>, scalar_prefetch = 0 : i64, scratch_operands = 0 : i64, tpu.core_type = #tpu.core_type<tc>, window_params = [{transform_indices = @transform_0, window_bounds = array<i64: 32, 128>}, {pipeline_mode = #tpu.pipeline_mode<synchronous>, transform_indices = @transform_1, window_bounds = array<i64: 128, 128>}, {pipeline_mode = #tpu.pipeline_mode<synchronous>, transform_indices = @transform_2, window_bounds = array<i64: 1, 128>}, {transform_indices = @transform_3, window_bounds = array<i64: 32, 128>}]} {
    %c0 = arith.constant 0 : index
    %c0_0 = arith.constant 0 : index
    %0 = vector.load %arg1[%c0, %c0_0] : memref<32x128xbf16, #tpu.memory_space<vmem>>, vector<32x128xbf16>
    %c0_1 = arith.constant 0 : index
    %c0_2 = arith.constant 0 : index
    %1 = vector.load %arg2[%c0_1, %c0_2] : memref<128x128xbf16, #tpu.memory_space<vmem>>, vector<128x128xbf16>
    %cst = arith.constant dense<0.000000e+00> : vector<32x128xf32>
    %2 = tpu.matmul %0, %1, %cst {dimension_numbers = #tpu.dot_dimension_numbers<[1], [0], [0], [1], [0, 0, 1, 1], [], []>} : vector<32x128xbf16>, vector<128x128xbf16>, vector<32x128xf32> -> vector<32x128xf32>
    %c0_3 = arith.constant 0 : index
    %c0_4 = arith.constant 0 : index
    %3 = vector.load %arg3[%c0_3, %c0_4] : memref<1x128xf32, #tpu.memory_space<vmem>>, vector<1x128xf32>
    %4 = vector.broadcast %3 : vector<1x128xf32> to vector<32x128xf32>
    %5 = arith.addf %2, %4 : vector<32x128xf32>
    %c0_5 = arith.constant 0 : index
    %c0_6 = arith.constant 0 : index
    %6 = vector.load %arg4[%c0_5, %c0_6] : memref<32x128xf32, #tpu.memory_space<vmem>>, vector<32x128xf32>
    tpu.vector_store %arg4[%c0_5, %c0_6], %5 {strides = array<i32>} : memref<32x128xf32, #tpu.memory_space<vmem>>, vector<32x128xf32>,
    return
  }
  func.func @transform_0(%arg0: i32) -> (i32, i32) {
    %c0_i32 = arith.constant 0 : i32
    %c0_i32_0 = arith.constant 0 : i32
    return %arg0, %c0_i32 : i32, i32
  }
  func.func @transform_1(%arg0: i32) -> (i32, i32) {
    %c0_i32 = arith.constant 0 : i32
    %c0_i32_0 = arith.constant 0 : i32
    %c0_i32_1 = arith.constant 0 : i32
    return %c0_i32, %c0_i32_0 : i32, i32
  }
  func.func @transform_2(%arg0: i32) -> (i32, i32) {
    %c0_i32 = arith.constant 0 : i32
    %c0_i32_0 = arith.constant 0 : i32
    %c0_i32_1 = arith.constant 0 : i32
    return %c0_i32, %c0_i32_0 : i32, i32
  }
  func.func @transform_3(%arg0: i32) -> (i32, i32) {
    %c0_i32 = arith.constant 0 : i32
    %c0_i32_0 = arith.constant 0 : i32
    return %arg0, %c0_i32 : i32, i32
  }
}

</mosaic_0001>

<llo_original>
// kernel: patch_embed.2
$region0: #{patch_embed.2}
  #allocation0 [shape = 'u32[]', space=smem, size = 0x4, offset = 0x4, fixed_abs, tag = 'smem constant byte address 0x4 - core index']
  #allocation1 [shape = 'u32[72,128]{1,0:T(1,128)}', space=vmem, size = 0x9000, scoped, tag = 'internal scratch']
  #allocation2 [shape = 'u32[2048]{0}', space=vmem, size = 0x2000, scoped, tag = 'scoped memory for patch_embed.2']
  #allocation3 [shape = 'u32[2048]{0}', space=vmem, size = 0x2000, scoped, tag = 'scoped memory for patch_embed.2']
  #allocation4 [shape = 'u32[2048]{0}', space=vmem, size = 0x2000, scoped, tag = 'scoped memory for patch_embed.2']
  #allocation5 [shape = 'u32[2048]{0}', space=vmem, size = 0x2000, scoped, tag = 'scoped memory for patch_embed.2']
  #allocation6 [shape = 'u32[2048]{0}', space=vmem, size = 0x2000, scoped, tag = 'scoped memory for patch_embed.2']
  #allocation7 [shape = 'u32[2048]{0}', space=vmem, size = 0x2000, scoped, tag = 'scoped memory for patch_embed.2']
  #allocation8 [shape = 'u32[2048]{0}', space=vmem, size = 0x2000, scoped, tag = 'scoped memory for patch_embed.2']
  #allocation9 [shape = 'u32[2048]{0}', space=vmem, size = 0x2000, scoped, tag = 'scoped memory for patch_embed.2']
  #allocation10 [shape = 'u32[2048]{0}', space=vmem, size = 0x2000, scoped, tag = 'scoped memory for patch_embed.2']
  #allocation11 [shape = 'u32[2048]{0}', space=vmem, size = 0x2000, scoped, tag = 'scoped memory for patch_embed.2']
  %s0 = inlined_call_operand.vmem [shape: bf16[32,128], index: 0, kind: input, shape index: {}]
  %s1 = inlined_call_operand.vmem [shape: bf16[64,32], index: 1, kind: input, shape index: {}]
  %s2 = inlined_call_operand.<no memory space> [shape: bf16[], index: 2, kind: input, shape index: {}]
  %s3 = inlined_call_operand.vmem [shape: f32[32], index: 3, kind: input, shape index: {}]
  %s4 = inlined_call_operand.<no memory space> [shape: f32[], index: 4, kind: input, shape index: {}]
  %s5 = inlined_call_operand.hbm [shape: f32[32,128], index: 5, kind: output, shape index: {}]
  %s6 = sld [smem:[#allocation0]]
  $region22: #{patch_embed.2} parent=0
    _
  %s8 = ssub.s32 1, %s6
  %s9 = scalar_select 0, %s8, %s6
  %v10 = vstv %s2
  %v11 = vunpack.i.l.bf16 %v10
  %v13 = vunpack.i.h.bf16 %v10
  %v15 = vstv %s4
  $region1: #{patch_embed.2} parent=0
    #allocation12 [shape = 'u8[16384]{0}', space=vmem, size = 0x4000, scoped, tag = 'output window, operand 0, single buffered']
    #allocation13 [shape = 's32[1]{0}', space=sflag, size = 0x4, scoped, tag = 'scoped memory for patch_embed.2']
    #allocation14 [shape = 'u8[32768]{0}', space=vmem, size = 0x8000, dematerialized = true, scoped, tag = 'FusionAdapter Buffer %fusion.1 = bf16[128,128]{1,0:T(8,128)(2,1)} fusion(%param_1.3, %param_2.2), kind=kLoop, calls=%fused_computation.2.clone, metadata={op_name="jit(patch_embed)/jit(_pad)/pad" stack_frame_id=12}']
    #allocation15 [shape = 'u8[512]{0}', space=vmem, size = 0x400, dematerialized = true, scoped, tag = 'FusionAdapter Buffer %fusion.2 = f32[1,128]{1,0:T(1,128)} fusion(%param_3.2, %param_4), kind=kLoop, calls=%fused_computation.3.clone, metadata={op_name="jit(patch_embed)/reshape" stack_frame_id=15}']
    %16 = vsyncpa [#allocation13], 0
    // Predicated region
    $region2: #{patch_embed.2} parent=1 // pred_check
      _
    $region3: #{patch_embed.2} parent=1 // pred_check_branch
      %18 = sbr.rel (0) target = $region5
    $region4: #{patch_embed.2} parent=1 // pred_region
      _
    $region5: #{patch_embed.2} parent=1 // pred_fallthru
      _
    // Predicated region
    $region6: #{patch_embed.2} parent=1 // pred_check
      _
    $region7: #{patch_embed.2} parent=1 // pred_check_branch
      %20 = sbr.rel (0) target = $region9
    $region8: #{patch_embed.2} parent=1 // pred_region
      _
    $region9: #{patch_embed.2} parent=1 // pred_fallthru
      _
    // Predicated region
    $region10: #{patch_embed.2} parent=1 // pred_check
      _
    $region11: #{patch_embed.2} parent=1 // pred_check_branch
      %22 = sbr.rel (0) target = $region13
    $region12: #{patch_embed.2} parent=1 // pred_region
      _
    $region13: #{patch_embed.2} parent=1 // pred_fallthru
      _
    %s24 = sor.u32 255, 127
    %s25 = sand.u32 %s24, 85
    %s26 = sshrl.u32 %s25, 1
    %s27 = sor.u32 %s25, %s26
    %s28 = sand.u32 51, %s27
    %s29 = sshrl.u32 %s28, 2
    %s30 = sor.u32 %s28, %s29
    %s31 = sand.u32 15, %s30
    %v32 = vld [vmem:[%s1] sm:%s31]
    %v33 = vunpack.c.l.bf16 %v32
    %v34 = vunpack.c.h.bf16 %v32
    %v35 = vlaneseq
    %v36 = vand.u32 %v35, 127
    %vm38 = vcmp.lt.s32.totalorder %v36, 32
    %v39 = vsel %vm38, %v33, %v11
    %v40 = vpack.c.bf16 0.0, %v39
    %s42 = ssub.s32 16, 1
    %43 = vst [vmem:[#allocation14] sm:%s42] %v40
    %s44 = scalar_lea.vmem %s1, 4
    %s46 = sor.u32 255, 127
    %s47 = sand.u32 %s46, 85
    %s48 = sshrl.u32 %s47, 1
    %s49 = sor.u32 %s47, %s48
    %s50 = sand.u32 51, %s49
    %s51 = sshrl.u32 %s50, 2
    %s52 = sor.u32 %s50, %s51
    %s53 = sand.u32 15, %s52
    %v54 = vld [vmem:[%s44] sm:%s53]
    %v55 = vunpack.c.l.bf16 %v54
    %v56 = vunpack.c.h.bf16 %v54
    %v57 = vlaneseq
    %v58 = vand.u32 %v57, 127
    %vm60 = vcmp.lt.s32.totalorder %v58, 32
    %v61 = vsel %vm60, %v55, %v11
    %s62 = scalar_lea.vmem [#allocation14], 4
    %v63 = vpack.c.bf16 0.0, %v61
    %s65 = ssub.s32 16, 1
    %66 = vst [vmem:[%s62] sm:%s65] %v63
    %s67 = scalar_lea.vmem %s1, 8
    %s69 = sor.u32 255, 127
    %s70 = sand.u32 %s69, 85
    %s71 = sshrl.u32 %s70, 1
    %s72 = sor.u32 %s70, %s71
    %s73 = sand.u32 51, %s72
    %s74 = sshrl.u32 %s73, 2
    %s75 = sor.u32 %s73, %s74
    %s76 = sand.u32 15, %s75
    %v77 = vld [vmem:[%s67] sm:%s76]
    %v78 = vunpack.c.l.bf16 %v77
    %v79 = vunpack.c.h.bf16 %v77
    %v80 = vlaneseq
    %v81 = vand.u32 %v80, 127
    %vm83 = vcmp.lt.s32.totalorder %v81, 32
    %v84 = vsel %vm83, %v78, %v11
    %s85 = scalar_lea.vmem [#allocation14], 8
    %v86 = vpack.c.bf16 0.0, %v84
    %s88 = ssub.s32 16, 1
    %89 = vst [vmem:[%s85] sm:%s88] %v86
    %s90 = scalar_lea.vmem %s1, 12
    %s92 = sor.u32 255, 127
    %s93 = sand.u32 %s92, 85
    %s94 = sshrl.u32 %s93, 1
    %s95 = sor.u32 %s93, %s94
    %s96 = sand.u32 51, %s95
    %s97 = sshrl.u32 %s96, 2
    %s98 = sor.u32 %s96, %s97
    %s99 = sand.u32 15, %s98
    %v100 = vld [vmem:[%s90] sm:%s99]
    %v101 = vunpack.c.l.bf16 %v100
    %v102 = vunpack.c.h.bf16 %v100
    %v103 = vlaneseq
    %v104 = vand.u32 %v103, 127
    %vm106 = vcmp.lt.s32.totalorder %v104, 32
    %v107 = vsel %vm106, %v101, %v11
    %s108 = scalar_lea.vmem [#allocation14], 12
    %v109 = vpack.c.bf16 0.0, %v107
    %s111 = ssub.s32 16, 1
    %112 = vst [vmem:[%s108] sm:%s111] %v109
    %s113 = scalar_lea.vmem %s1, 16
    %s115 = sor.u32 255, 127
    %s116 = sand.u32 %s115, 85
    %s117 = sshrl.u32 %s116, 1
    %s118 = sor.u32 %s116, %s117
    %s119 = sand.u32 51, %s118
    %s120 = sshrl.u32 %s119, 2
    %s121 = sor.u32 %s119, %s120
    %s122 = sand.u32 15, %s121
    %v123 = vld [vmem:[%s113] sm:%s122]
    %v124 = vunpack.c.l.bf16 %v123
    %v125 = vunpack.c.h.bf16 %v123
    %v126 = vlaneseq
    %v127 = vand.u32 %v126, 127
    %vm129 = vcmp.lt.s32.totalorder %v127, 32
    %v130 = vsel %vm129, %v124, %v11
    %s131 = scalar_lea.vmem [#allocation14], 16
    %v132 = vpack.c.bf16 0.0, %v130
    %s134 = ssub.s32 16, 1
    %135 = vst [vmem:[%s131] sm:%s134] %v132
    %s136 = scalar_lea.vmem %s1, 20
    %s138 = sor.u32 255, 127
    %s139 = sand.u32 %s138, 85
    %s140 = sshrl.u32 %s139, 1
    %s141 = sor.u32 %s139, %s140
    %s142 = sand.u32 51, %s141
    %s143 = sshrl.u32 %s142, 2
    %s144 = sor.u32 %s142, %s143
    %s145 = sand.u32 15, %s144
    %v146 = vld [vmem:[%s136] sm:%s145]
    %v147 = vunpack.c.l.bf16 %v146
    %v148 = vunpack.c.h.bf16 %v146
    %v149 = vlaneseq
    %v150 = vand.u32 %v149, 127
    %vm152 = vcmp.lt.s32.totalorder %v150, 32
    %v153 = vsel %vm152, %v147, %v11
    %s154 = scalar_lea.vmem [#allocation14], 20
    %v155 = vpack.c.bf16 0.0, %v153
    %s157 = ssub.s32 16, 1
    %158 = vst [vmem:[%s154] sm:%s157] %v155
    %s159 = scalar_lea.vmem %s1, 24
    %s161 = sor.u32 255, 127
    %s162 = sand.u32 %s161, 85
    %s163 = sshrl.u32 %s162, 1
    %s164 = sor.u32 %s162, %s163
    %s165 = sand.u32 51, %s164
    %s166 = sshrl.u32 %s165, 2
    %s167 = sor.u32 %s165, %s166
    %s168 = sand.u32 15, %s167
    %v169 = vld [vmem:[%s159] sm:%s168]
    %v170 = vunpack.c.l.bf16 %v169
    %v171 = vunpack.c.h.bf16 %v169
    %v172 = vlaneseq
    %v173 = vand.u32 %v172, 127
    %vm175 = vcmp.lt.s32.totalorder %v173, 32
    %v176 = vsel %vm175, %v170, %v11
    %s177 = scalar_lea.vmem [#allocation14], 24
    %v178 = vpack.c.bf16 0.0, %v176
    %s180 = ssub.s32 16, 1
    %181 = vst [vmem:[%s177] sm:%s180] %v178
    %s182 = scalar_lea.vmem %s1, 28
    %s184 = sor.u32 255, 127
    %s185 = sand.u32 %s184, 85
    %s186 = sshrl.u32 %s185, 1
    %s187 = sor.u32 %s185, %s186
    %s188 = sand.u32 51, %s187
    %s189 = sshrl.u32 %s188, 2
    %s190 = sor.u32 %s188, %s189
    %s191 = sand.u32 15, %s190
    %v192 = vld [vmem:[%s182] sm:%s191]
    %v193 = vunpack.c.l.bf16 %v192
    %v194 = vunpack.c.h.bf16 %v192
    %v195 = vlaneseq
    %v196 = vand.u32 %v195, 127
    %vm198 = vcmp.lt.s32.totalorder %v196, 32
    %v199 = vsel %vm198, %v193, %v11
    %s200 = scalar_lea.vmem [#allocation14], 28
    %v201 = vpack.c.bf16 0.0, %v199
    %s203 = ssub.s32 16, 1
    %204 = vst [vmem:[%s200] sm:%s203] %v201
    %s205 = scalar_lea.vmem [#allocation14], 32
    %v206 = vpack.c.bf16 0.0, %v11
    %s208 = ssub.s32 16, 1
    %209 = vst [vmem:[%s205] sm:%s208] %v206
    %s210 = scalar_lea.vmem [#allocation14], 36
    %v211 = vpack.c.bf16 0.0, %v11
    %s213 = ssub.s32 16, 1
    %214 = vst [vmem:[%s210] sm:%s213] %v211
    %s215 = scalar_lea.vmem [#allocation14], 40
    %v216 = vpack.c.bf16 0.0, %v11
    %s218 = ssub.s32 16, 1
    %219 = vst [vmem:[%s215] sm:%s218] %v216
    %s220 = scalar_lea.vmem [#allocation14], 44
    %v221 = vpack.c.bf16 0.0, %v11
    %s223 = ssub.s32 16, 1
    %224 = vst [vmem:[%s220] sm:%s223] %v221
    %s225 = scalar_lea.vmem [#allocation14], 48
    %v226 = vpack.c.bf16 0.0, %v11
    %s228 = ssub.s32 16, 1
    %229 = vst [vmem:[%s225] sm:%s228] %v226
    %s230 = scalar_lea.vmem [#allocation14], 52
    %v231 = vpack.c.bf16 0.0, %v11
    %s233 = ssub.s32 16, 1
    %234 = vst [vmem:[%s230] sm:%s233] %v231
    %s235 = scalar_lea.vmem [#allocation14], 56
    %v236 = vpack.c.bf16 0.0, %v11
    %s238 = ssub.s32 16, 1
    %239 = vst [vmem:[%s235] sm:%s238] %v236
    %s240 = scalar_lea.vmem [#allocation14], 60
    %v241 = vpack.c.bf16 0.0, %v11
    %s243 = ssub.s32 16, 1
    %244 = vst [vmem:[%s240] sm:%s243] %v241
    %v245 = vld [vmem:[%s3] sm:$0x1]
    %v246 = vlaneseq
    %vm248 = vcmp.lt.s32.totalorder %v246, 32
    %v249 = vsel %vm248, %v245, %v15
    %s251 = ssub.s32 2, 1
    %252 = vst [vmem:[#allocation15] sm:%s251] %v249
    %v253 = vld [vmem:[%s0] sm:$0xf]
    %v254 = vld [vmem:[%s0 + $0x4] sm:$0xf]
    %v255 = vld [vmem:[%s0 + $0x8] sm:$0xf]
    %v256 = vld [vmem:[%s0 + $0xc] sm:$0xf]
    %v257 = vld [vmem:[#allocation14] sm:$0xf]
    %v258 = vld [vmem:[#allocation14 + $0x4] sm:$0xf]
    %v259 = vld [vmem:[#allocation14 + $0x8] sm:$0xf]
    %v260 = vld [vmem:[#allocation14 + $0xc] sm:$0xf]
    %v261 = vld [vmem:[#allocation14 + $0x10] sm:$0xf]
    %v262 = vld [vmem:[#allocation14 + $0x14] sm:$0xf]
    %v263 = vld [vmem:[#allocation14 + $0x18] sm:$0xf]
    %v264 = vld [vmem:[#allocation14 + $0x1c] sm:$0xf]
    %v265 = vld [vmem:[#allocation14 + $0x20] sm:$0xf]
    %v266 = vld [vmem:[#allocation14 + $0x24] sm:$0xf]
    %v267 = vld [vmem:[#allocation14 + $0x28] sm:$0xf]
    %v268 = vld [vmem:[#allocation14 + $0x2c] sm:$0xf]
    %v269 = vld [vmem:[#allocation14 + $0x30] sm:$0xf]
    %v270 = vld [vmem:[#allocation14 + $0x34] sm:$0xf]
    %v271 = vld [vmem:[#allocation14 + $0x38] sm:$0xf]
    %v272 = vld [vmem:[#allocation14 + $0x3c] sm:$0xf]
    %v273 = vld [vmem:[#allocation15] sm:$0x1]
    %v275 = vperm.slane %v273, 0
    %v281 = vunpack.c.l.b16 %v253
    %v282 = vunpack.c.l.b16 %v254
    %v283 = vunpack.c.l.b16 %v255
    %v284 = vunpack.c.l.b16 %v256
    %v285 = vpack.c.b16 %v282, %v281
    %v286 = vpack.c.b16 %v284, %v283
    %v305 = vunpack.c.l.b16 %v257
    %v306 = vunpack.c.l.b16 %v258
    %v307 = vunpack.c.l.b16 %v259
    %v308 = vunpack.c.l.b16 %v260
    %v309 = vunpack.c.l.b16 %v261
    %v310 = vunpack.c.l.b16 %v262
    %v311 = vunpack.c.l.b16 %v263
    %v312 = vunpack.c.l.b16 %v264
    %v313 = vunpack.c.l.b16 %v265
    %v314 = vunpack.c.l.b16 %v266
    %v315 = vunpack.c.l.b16 %v267
    %v316 = vunpack.c.l.b16 %v268
    %v317 = vunpack.c.l.b16 %v269
    %v318 = vunpack.c.l.b16 %v270
    %v319 = vunpack.c.l.b16 %v271
    %v320 = vunpack.c.l.b16 %v272
    %v321 = vpack.c.b16 %v306, %v305
    %v322 = vpack.c.b16 %v308, %v307
    %v323 = vpack.c.b16 %v310, %v309
    %v324 = vpack.c.b16 %v312, %v311
    %v325 = vpack.c.b16 %v314, %v313
    %v326 = vpack.c.b16 %v316, %v315
    %v327 = vpack.c.b16 %v318, %v317
    %v328 = vpack.c.b16 %v320, %v319
    %337 = vmatpush.bf16.msra.mxu0 %v328
    %338 = vmatpush.bf16.msra.mxu0 %v327
    %339 = vmatpush.bf16.msra.mxu0 %v326
    %340 = vmatpush.bf16.msra.mxu0 %v325
    %341 = vmatpush.bf16.msra.mxu0 %v324
    %342 = vmatpush.bf16.msra.mxu0 %v323
    %343 = vmatpush.bf16.msra.mxu0 %v322
    %344 = vmatpush.bf16.msra.mxu0 %v321
    %345 = vmatmul.bf16.gmra.mxu0 %v285
    %v346 = vpop.f32.mrf.mxu0
    %v347 = vadd.f32 %v275, %v346
    %v348 = vpop.f32.mrf.mxu0
    %v349 = vadd.f32 %v275, %v348
    %350 = vmatmul.bf16.gmra.mxu0 %v286
    %v351 = vpop.f32.mrf.mxu0
    %v352 = vadd.f32 %v275, %v351
    %v353 = vpop.f32.mrf.mxu0
    %v354 = vadd.f32 %v275, %v353
    %355 = vdwg.mxu0
    %356 = vst [vmem:[#allocation12] sm:$0xff] %v347
    %357 = vst [vmem:[#allocation12 + $0x8] sm:$0xff] %v349
    %358 = vst [vmem:[#allocation12 + $0x10] sm:$0xff] %v352
    %359 = vst [vmem:[#allocation12 + $0x18] sm:$0xff] %v354
    // Predicated region
    $region14: #{patch_embed.2} parent=1 // pred_check
      _
    $region15: #{patch_embed.2} parent=1 // pred_check_branch
      %361 = sbr.rel (0) target = $region17
    $region16: #{patch_embed.2} parent=1 // pred_region
      %363 = vsyncadd [#allocation13], 0
      %s364 = sshll.u32 [#allocation12], 4
      %s365 = int_to_ptr.vmem [resolvable:$true] %s364
      %s366 = sshll.u32 %s5, 4
      %s367 = int_to_ptr.hbm [resolvable:$true] %s366
      %372 = dma.vmem_to_hbm [thread:$0]  %s365, 512, %s367, [#allocation13], 128, 128, 8
    $region17: #{patch_embed.2} parent=1 // pred_fallthru
      _
    // Predicated region
    $region18: #{patch_embed.2} parent=1 // pred_check
      _
    $region19: #{patch_embed.2} parent=1 // pred_check_branch
      %374 = sbr.rel (0) target = $region21
    $region20: #{patch_embed.2} parent=1 // pred_region
      %376 = dma.done [#allocation13], 512
    $region21: #{patch_embed.2} parent=1 // pred_fallthru
      _
    %377 = vsyncpa [#allocation13], 1

</llo_original>
